<compile_context>
chip_gen: v7x
topology: tpu7x:2x2x1
jax: 0.10.0
libtpu: 0.0.40
codegen_flags: <defaults>
</compile_context>

<pallas_src>
import math

import jax
import jax.numpy as jnp
from jax.experimental import pallas as pl
from jax.experimental.pallas import tpu as pltpu


# ----------------------------------------------------------------------------
# Hardware-aware budgets
# ----------------------------------------------------------------------------

def _vmem_limits():
    """Returns (vmem_limit_bytes, per-step working-set budget) for this chip."""
    try:
        cap = int(pltpu.get_tpu_info().vmem_capacity_bytes)
    except Exception:  # conservative fallback if the query is unavailable
        cap = 64 * 1024 * 1024
    # 3/4 of physical VMEM, capped: v5e/v6e (128 MiB) -> 96 MiB, v7x (64 MiB) -> 48 MiB.
    limit = max(32 * 1024 * 1024, min(cap * 3 // 4, 96 * 1024 * 1024))
    return limit, limit // 2


def _is_multi_tensorcore_chip():
    """True on chips with >1 TensorCore sharing the grid (v7x)."""
    try:
        kind = jax.devices()[0].device_kind.lower()
    except Exception:
        return False
    return "v7" in kind


# ----------------------------------------------------------------------------
# Kernels
# ----------------------------------------------------------------------------

def _make_attn_kernel(scale, lk_valid, lk_padded):
    """Full-softmax kernel that also writes the probability matrix."""

    def kernel(q_ref, k_ref, v_ref, o_ref, a_ref):
        # Blocks: q [Bt, TQ, D], k [Bt, Lkp, D], v [Bt, Lkp, Dvp]
        q = q_ref[...]
        k = k_ref[...]
        v = v_ref[...]

        # Fold 1/sqrt(D) into q (Lq*D multiplies instead of Lq*Lk).
        qs = q * jnp.asarray(scale, q.dtype)

        # scores = qs @ k^T via transposed contraction (no XLU transpose pass).
        s = jax.lax.dot_general(
            qs, k,
            dimension_numbers=(((2,), (2,)), ((0,), (0,))),
            preferred_element_type=jnp.float32,
        )  # [Bt, TQ, Lkp] f32

        if lk_valid < lk_padded:
            # Zero-padded key columns must not receive probability mass.
            col = jax.lax.broadcasted_iota(jnp.int32, s.shape, 2)
            s = jnp.where(col < lk_valid, s, -jnp.inf)

        # Numerically stable softmax over the (full) key axis.
        m = jnp.max(s, axis=-1, keepdims=True)
        e = jnp.exp(s - m)
        denom = jnp.sum(e, axis=-1, keepdims=True)
        attn_f32 = e * pl.reciprocal(denom, approx=True)  # divide on the EUP slot

        # Single cast of the probabilities; reuse it for the PV matmul and,
        # when dtypes match, for the attention-score store.
        p = attn_f32.astype(v.dtype)
        out = jax.lax.dot_general(
            p, v,
            dimension_numbers=(((2,), (1,)), ((0,), (0,))),
            preferred_element_type=jnp.float32,
        )  # [Bt, TQ, Dvp] f32

        a_ref[...] = p if a_ref.dtype == p.dtype else attn_f32.astype(a_ref.dtype)
        o_ref[...] = out.astype(o_ref.dtype)

    return kernel


def _make_flash_kernel(scale):
    """Flash-style online-softmax kernel (no probability matrix emitted)."""

    def kernel(q_ref, k_ref, v_ref, o_ref, m_sc, l_sc, acc_sc):
        kv = pl.program_id(2)

        @pl.when(kv == 0)
        def _():
            m_sc[...] = jnp.full_like(m_sc, -jnp.inf)
            l_sc[...] = jnp.zeros_like(l_sc)
            acc_sc[...] = jnp.zeros_like(acc_sc)

        q = q_ref[...]
        qs = q * jnp.asarray(scale, q.dtype)
        s = jax.lax.dot_general(
            qs, k_ref[...],
            dimension_numbers=(((2,), (2,)), ((0,), (0,))),
            preferred_element_type=jnp.float32,
        )  # [Bt, TQ, TK] f32

        m_prev = m_sc[...]
        m_new = jnp.maximum(m_prev, jnp.max(s, axis=-1, keepdims=True))
        alpha = jnp.exp(m_prev - m_new)
        p = jnp.exp(s - m_new)
        l_sc[...] = alpha * l_sc[...] + jnp.sum(p, axis=-1, keepdims=True)
        acc_sc[...] = alpha * acc_sc[...] + jax.lax.dot_general(
            p.astype(v_ref.dtype), v_ref[...],
            dimension_numbers=(((2,), (1,)), ((0,), (0,))),
            preferred_element_type=jnp.float32,
        )
        m_sc[...] = m_new

        @pl.when(kv == pl.num_programs(2) - 1)
        def _():
            o_ref[...] = (acc_sc[...] *
                          pl.reciprocal(l_sc[...], approx=True)).astype(o_ref.dtype)

    return kernel


# ----------------------------------------------------------------------------
# Tiling / padding helpers
# ----------------------------------------------------------------------------

def _round_up(n, m):
    return ((n + m - 1) // m) * m


def _pad_axis(x, axis, size):
    pad = size - x.shape[axis]
    if pad == 0:
        return x
    widths = [(0, 0)] * x.ndim
    widths[axis] = (0, pad)
    return jnp.pad(x, widths)


def _pick_tiles_attn(B, Lq, Lk, D, Dv, itemsize, attn_itemsize, step_budget):
    tq_min = 16 if itemsize < 4 else 8  # bf16 sublane packing is (16, 128)
    tq_candidates = [t for t in (1024, 512, 256, 128, 64, 32, 16, 8) if t >= tq_min]
    bt_candidates = [d for d in range(min(B, 8), 0, -1) if B % d == 0]

    def step_bytes(bt, tq):
        q_b = bt * tq * D * itemsize
        o_b = bt * tq * Dv * itemsize
        a_b = bt * tq * Lk * attn_itemsize
        kv_b = bt * Lk * (D + Dv) * itemsize
        # ~4 live f32 [bt, tq, Lk] temporaries: scores, exp, probs, cast copy.
        scratch = 4 * bt * tq * Lk * 4
        # q / out / attn blocks are double-buffered; K/V are resident along the
        # Lq axis but still double-buffered by the pipeliner.
        return 2 * (q_b + o_b + a_b) + 2 * kv_b + scratch

    for tq in tq_candidates:          # prefer the largest query tile
        if tq > Lq or Lq % tq:
            continue
        for bt in bt_candidates:      # then the largest batch tile that fits
            if step_bytes(bt, tq) <= step_budget:
                return bt, tq
    # Nothing fits the per-step budget: take the smallest legal tile and let
    # vmem_limit_bytes absorb it (robustness fallback for extreme shapes).
    divs = [t for t in tq_candidates if t <= Lq and Lq % t == 0]
    return 1, (divs[-1] if divs else Lq)


def _pick_tiles_flash(B, Lq, Lk, D, Dv, itemsize, step_budget):
    tq_min = 16 if itemsize < 4 else 8
    tq_candidates = [t for t in (512, 256, 128, 64, 32, 16, 8) if t >= tq_min]
    bt_candidates = [d for d in range(min(B, 8), 0, -1) if B % d == 0]
    tk = next((t for t in (512, 256, 128) if t <= Lk and Lk % t == 0), Lk)

    def step_bytes(bt, tq):
        q_b = bt * tq * D * itemsize
        o_b = bt * tq * Dv * itemsize
        kv_b = bt * tk * (D + Dv) * itemsize
        acc_b = bt * tq * (Dv + 2) * 4            # m / l / acc accumulators
        scratch = 3 * bt * tq * tk * 4            # scores / exp temporaries
        return 2 * (q_b + o_b + kv_b) + acc_b + scratch

    for tq in tq_candidates:
        if tq > Lq or Lq % tq:
            continue
        for bt in bt_candidates:
            if step_bytes(bt, tq) <= step_budget:
                return bt, tq, tk
    divs = [t for t in tq_candidates if t <= Lq and Lq % t == 0]
    return 1, (divs[-1] if divs else Lq), tk


def _ensure_two_parallel_steps(B, Lq, bt, tq, itemsize):
    """On multi-TensorCore chips (v7x) keep >= 2 steps on the parallel axes."""
    if not _is_multi_tensorcore_chip():
        return bt, tq
    if (B // bt) * (Lq // tq) >= 2:
        return bt, tq
    if bt > 1:
        for d in range(bt // 2, 0, -1):
            if B % d == 0:
                return d, tq
    tq_min = 16 if itemsize < 4 else 8
    for t in range(tq // 2, tq_min - 1, -1):
        if Lq % t == 0 and t % 8 == 0:
            return bt, t
    return bt, tq


# ----------------------------------------------------------------------------
# Public wrapper
# ----------------------------------------------------------------------------

def scaled_dot_product_attention(q, k, v, *, return_attention_score=True,
                                 attention_score_dtype=None):
    """q: [B, Lq, D], k: [B, Lk, D], v: [B, Lk, Dv].

    return_attention_score=True  -> (output, attention_score), matching the
                                    PyTorch module (dropout is inference identity).
    return_attention_score=False -> (output, None) via a flash-style kernel that
                                    never materializes the [B, Lq, Lk] matrix.
    attention_score_dtype         -> dtype of the emitted probabilities
                                    (default q.dtype; bf16 halves the writeback).
    """
    B, Lq, D = q.shape
    _, Lk, _ = k.shape
    Dv = v.shape[-1]
    itemsize = jnp.dtype(q.dtype).itemsize
    scale = 1.0 / math.sqrt(D)
    vmem_limit, step_budget = _vmem_limits()

    # Lane-density padding: last dims of HBM stores (Dv for the output, Lk for
    # the attention matrix) padded up to 128 when smaller -> unmasked vst's.
    Dv_p = _round_up(Dv, 128) if Dv < 128 else Dv
    v_p = _pad_axis(v, 2, Dv_p)

    if return_attention_score:
        attn_dtype = jnp.dtype(attention_score_dtype or q.dtype)
        Lk_p = _round_up(Lk, 128) if Lk < 128 else Lk
        k_p = _pad_axis(k, 1, Lk_p)
        v_pp = _pad_axis(v_p, 1, Lk_p)

        Bt, TQ = _pick_tiles_attn(B, Lq, Lk_p, D, Dv_p, itemsize,
                                  attn_dtype.itemsize, step_budget)
        Bt, TQ = _ensure_two_parallel_steps(B, Lq, Bt, TQ, itemsize)
        grid = (B // Bt, Lq // TQ)

        cost = pl.CostEstimate(
            flops=2 * B * Lq * Lk_p * (D + Dv_p),
            transcendentals=B * Lq * Lk_p,
            bytes_accessed=itemsize * (B * Lq * D + B * Lk_p * D + B * Lk_p * Dv_p
                                       + B * Lq * Dv_p)
            + attn_dtype.itemsize * B * Lq * Lk_p,
        )

        out, attn = pl.pallas_call(
            _make_attn_kernel(scale, Lk, Lk_p),
            out_shape=(
                jax.ShapeDtypeStruct((B, Lq, Dv_p), q.dtype),
                jax.ShapeDtypeStruct((B, Lq, Lk_p), attn_dtype),
            ),
            grid_spec=pltpu.PrefetchScalarGridSpec(
                num_scalar_prefetch=0,
                grid=grid,
                in_specs=[
                    # q tile moves along the Lq axis.
                    pl.BlockSpec((Bt, TQ, D), lambda b, i: (b, i, 0)),
                    # K / V stay resident across the Lq axis (same block index).
                    pl.BlockSpec((Bt, Lk_p, D), lambda b, i: (b, 0, 0)),
                    pl.BlockSpec((Bt, Lk_p, Dv_p), lambda b, i: (b, 0, 0)),
                ],
                out_specs=[
                    pl.BlockSpec((Bt, TQ, Dv_p), lambda b, i: (b, i, 0)),
                    pl.BlockSpec((Bt, TQ, Lk_p), lambda b, i: (b, i, 0)),
                ],
            ),
            compiler_params=pltpu.CompilerParams(
                dimension_semantics=("parallel", "parallel"),
                vmem_limit_bytes=vmem_limit,
            ),
            cost_estimate=cost,
        )(q, k_p, v_pp)

        if Dv_p != Dv:
            out = out[:, :, :Dv]
        if Lk_p != Lk:
            attn = attn[:, :, :Lk]
        return out, attn

    # ---- Flash-style path: no probability matrix, Lk-tiled online softmax ----
    Bt, TQ, TK = _pick_tiles_flash(B, Lq, Lk, D, Dv_p, itemsize, step_budget)
    Bt, TQ = _ensure_two_parallel_steps(B, Lq, Bt, TQ, itemsize)
    grid = (B // Bt, Lq // TQ, Lk // TK)

    cost = pl.CostEstimate(
        flops=2 * B * Lq * Lk * (D + Dv_p),
        transcendentals=B * Lq * Lk,
        bytes_accessed=itemsize * (B * Lq * D + B * Lk * D + B * Lk * Dv_p
                                   + B * Lq * Dv_p),
    )

    out = pl.pallas_call(
        _make_flash_kernel(scale),
        out_shape=jax.ShapeDtypeStruct((B, Lq, Dv_p), q.dtype),
        grid_spec=pltpu.PrefetchScalarGridSpec(
            num_scalar_prefetch=0,
            grid=grid,
            in_specs=[
                pl.BlockSpec((Bt, TQ, D), lambda b, i, kv: (b, i, 0)),
                pl.BlockSpec((Bt, TK, D), lambda b, i, kv: (b, kv, 0)),
                pl.BlockSpec((Bt, TK, Dv_p), lambda b, i, kv: (b, kv, 0)),
            ],
            out_specs=pl.BlockSpec((Bt, TQ, Dv_p), lambda b, i, kv: (b, i, 0)),
            scratch_shapes=[
                pltpu.VMEM((Bt, TQ, 1), jnp.float32),      # running max
                pltpu.VMEM((Bt, TQ, 1), jnp.float32),      # running denom
                pltpu.VMEM((Bt, TQ, Dv_p), jnp.float32),   # output accumulator
            ],
        ),
        compiler_params=pltpu.CompilerParams(
            dimension_semantics=("parallel", "parallel", "arbitrary"),
            vmem_limit_bytes=vmem_limit,
        ),
        cost_estimate=cost,
    )(q, k, v_p)

    if Dv_p != Dv:
        out = out[:, :, :Dv]
    return out, None


# ----------------------------------------------------------------------------
# Reference + self-test
# ----------------------------------------------------------------------------

def _reference(q, k, v):
    s = jnp.einsum("bqd,bkd->bqk", q.astype(jnp.float32), k.astype(jnp.float32))
    s = s / jnp.sqrt(jnp.float32(k.shape[-1]))
    attn = jax.nn.softmax(s, axis=-1)
    out = jnp.einsum("bqk,bkd->bqd", attn, v.astype(jnp.float32))
    return out, attn


if __name__ == "__main__":
    key = jax.random.PRNGKey(0)

    # --- Small shapes consistent with the module (batch=2, seq=8, hidden=32).
    kq, kk, kv = jax.random.split(key, 3)
    B, Lq, Lk, D, Dv = 2, 8, 8, 32, 32
    q = jax.random.normal(kq, (B, Lq, D), dtype=jnp.float32)
    k = jax.random.normal(kk, (B, Lk, D), dtype=jnp.float32)
    v = jax.random.normal(kv, (B, Lk, Dv), dtype=jnp.float32)

    out, attn = scaled_dot_product_attention(q, k, v)
    jax.block_until_ready((out, attn))

    ref_out, ref_attn = _reference(q, k, v)
    assert out.shape == (B, Lq, Dv) and attn.shape == (B, Lq, Lk)
    assert jnp.allclose(out, ref_out, atol=2e-3, rtol=2e-3), "output mismatch"
    assert jnp.allclose(attn, ref_attn, atol=2e-3, rtol=2e-3), "attn mismatch"

    # --- Moderate shapes: exercise Lq tiling, padded-Dv path and both kernels.
    kq2, kk2, kv2 = jax.random.split(jax.random.PRNGKey(1), 3)
    B2, Lq2, Lk2, D2, Dv2 = 2, 512, 128, 64, 64
    q2 = jax.random.normal(kq2, (B2, Lq2, D2), dtype=jnp.float32)
    k2 = jax.random.normal(kk2, (B2, Lk2, D2), dtype=jnp.float32)
    v2 = jax.random.normal(kv2, (B2, Lk2, Dv2), dtype=jnp.float32)
    ref_out2, ref_attn2 = _reference(q2, k2, v2)

    # (a) probabilities requested in bf16 (halves the dominant HBM writeback).
    out2, attn2 = scaled_dot_product_attention(
        q2, k2, v2, attention_score_dtype=jnp.bfloat16)
    jax.block_until_ready((out2, attn2))
    assert jnp.allclose(out2, ref_out2, atol=2e-3, rtol=2e-3), "tiled output mismatch"
    assert jnp.allclose(attn2.astype(jnp.float32), ref_attn2,
                        atol=1e-2, rtol=1e-2), "tiled attn mismatch"

    # (b) flash-style path: probability matrix never materialized.
    out3, attn3 = scaled_dot_product_attention(
        q2, k2, v2, return_attention_score=False)
    jax.block_until_ready(out3)
    assert attn3 is None
    assert jnp.allclose(out3, ref_out2, atol=2e-3, rtol=2e-3), "flash output mismatch"

    print("KERNEL_OK")
</pallas_src>

<mosaic_0001>
module attributes {stable_mosaic.version = 11 : i64} {
  func.func @kernel(%arg0: i32, %arg1: i32, %arg2: memref<2x8x32xf32, #tpu.memory_space<vmem>>, %arg3: memref<2x128x32xf32, #tpu.memory_space<vmem>>, %arg4: memref<2x128x128xf32, #tpu.memory_space<vmem>>, %arg5: memref<2x8x128xf32, #tpu.memory_space<vmem>>, %arg6: memref<2x8x128xf32, #tpu.memory_space<vmem>>) attributes {dimension_semantics = [#tpu.dimension_semantics<parallel>, #tpu.dimension_semantics<parallel>], iteration_bounds = array<i64: 1, 1>, scalar_prefetch = 0 : i64, scratch_operands = 0 : i64, tpu.core_type = #tpu.core_type<tc>, window_params = [{transform_indices = @transform_0, window_bounds = array<i64: 2, 8, 32>}, {transform_indices = @transform_1, window_bounds = array<i64: 2, 128, 32>}, {transform_indices = @transform_2, window_bounds = array<i64: 2, 128, 128>}, {transform_indices = @transform_3, window_bounds = array<i64: 2, 8, 128>}, {transform_indices = @transform_4, window_bounds = array<i64: 2, 8, 128>}]} {
    %c0 = arith.constant 0 : index
    %c0_0 = arith.constant 0 : index
    %c0_1 = arith.constant 0 : index
    %0 = vector.load %arg2[%c0, %c0_0, %c0_1] : memref<2x8x32xf32, #tpu.memory_space<vmem>>, vector<2x8x32xf32>
    %c0_2 = arith.constant 0 : index
    %c0_3 = arith.constant 0 : index
    %c0_4 = arith.constant 0 : index
    %1 = vector.load %arg3[%c0_2, %c0_3, %c0_4] : memref<2x128x32xf32, #tpu.memory_space<vmem>>, vector<2x128x32xf32>
    %c0_5 = arith.constant 0 : index
    %c0_6 = arith.constant 0 : index
    %c0_7 = arith.constant 0 : index
    %2 = vector.load %arg4[%c0_5, %c0_6, %c0_7] : memref<2x128x128xf32, #tpu.memory_space<vmem>>, vector<2x128x128xf32>
    %cst = arith.constant 0.176776692 : f32
    %3 = vector.broadcast %cst : f32 to vector<2x8x32xf32>
    %4 = arith.mulf %0, %3 : vector<2x8x32xf32>
    %cst_8 = arith.constant dense<0.000000e+00> : vector<2x8x128xf32>
    %5 = tpu.matmul %4, %1, %cst_8 {dimension_numbers = #tpu.dot_dimension_numbers<[2], [2], [1], [1], [0, 0, 0, 1, 1, 1], [0], [0]>} : vector<2x8x32xf32>, vector<2x128x32xf32>, vector<2x8x128xf32> -> vector<2x8x128xf32>
    %6 = tpu.iota {dimensions = array<i32: 2>} : vector<2x8x128xi32>
    %c8_i32 = arith.constant 8 : i32
    %7 = vector.broadcast %c8_i32 : i32 to vector<2x8x128xi32>
    %8 = arith.cmpi slt, %6, %7 : vector<2x8x128xi32>
    %cst_9 = arith.constant 0xFF800000 : f32
    %9 = vector.broadcast %cst_9 : f32 to vector<2x8x128xf32>
    %10 = arith.select %8, %5, %9 : vector<2x8x128xi1>, vector<2x8x128xf32>
    %cst_10 = arith.constant dense<0xFF800000> : vector<2x8xf32>
    %11 = vector.multi_reduction <maximumf>, %10, %cst_10 [2] : vector<2x8x128xf32> to vector<2x8xf32>
    %12 = vector.shape_cast %11 : vector<2x8xf32> to vector<2x8x1xf32>
    %13 = vector.broadcast %12 : vector<2x8x1xf32> to vector<2x8x128xf32>
    %14 = arith.subf %10, %13 : vector<2x8x128xf32>
    %15 = math.exp %14 : vector<2x8x128xf32>
    %cst_11 = arith.constant dense<0.000000e+00> : vector<2x8xf32>
    %16 = vector.multi_reduction <add>, %15, %cst_11 [2] : vector<2x8x128xf32> to vector<2x8xf32>
    %17 = vector.shape_cast %16 : vector<2x8xf32> to vector<2x8x1xf32>
    %18 = tpu.reciprocal %17 {approx = true} : vector<2x8x1xf32> -> vector<2x8x1xf32>
    %19 = vector.broadcast %18 : vector<2x8x1xf32> to vector<2x8x128xf32>
    %20 = arith.mulf %15, %19 : vector<2x8x128xf32>
    %cst_12 = arith.constant dense<0.000000e+00> : vector<2x8x128xf32>
    %21 = tpu.matmul %20, %2, %cst_12 {dimension_numbers = #tpu.dot_dimension_numbers<[2], [1], [1], [2], [0, 0, 0, 1, 1, 2], [0], [0]>} : vector<2x8x128xf32>, vector<2x128x128xf32>, vector<2x8x128xf32> -> vector<2x8x128xf32>
    %c0_13 = arith.constant 0 : index
    %c0_14 = arith.constant 0 : index
    %c0_15 = arith.constant 0 : index
    %22 = vector.load %arg6[%c0_13, %c0_14, %c0_15] : memref<2x8x128xf32, #tpu.memory_space<vmem>>, vector<2x8x128xf32>
    tpu.vector_store %arg6[%c0_13, %c0_14, %c0_15], %20 {strides = array<i32>} : memref<2x8x128xf32, #tpu.memory_space<vmem>>, vector<2x8x128xf32>,
    %c0_16 = arith.constant 0 : index
    %c0_17 = arith.constant 0 : index
    %c0_18 = arith.constant 0 : index
    %23 = vector.load %arg5[%c0_16, %c0_17, %c0_18] : memref<2x8x128xf32, #tpu.memory_space<vmem>>, vector<2x8x128xf32>
    tpu.vector_store %arg5[%c0_16, %c0_17, %c0_18], %21 {strides = array<i32>} : memref<2x8x128xf32, #tpu.memory_space<vmem>>, vector<2x8x128xf32>,
    return
  }
  func.func @transform_0(%arg0: i32, %arg1: i32) -> (i32, i32, i32) {
    %c0_i32 = arith.constant 0 : i32
    %c0_i32_0 = arith.constant 0 : i32
    return %arg0, %arg1, %c0_i32 : i32, i32, i32
  }
  func.func @transform_1(%arg0: i32, %arg1: i32) -> (i32, i32, i32) {
    %c0_i32 = arith.constant 0 : i32
    %c0_i32_0 = arith.constant 0 : i32
    %c0_i32_1 = arith.constant 0 : i32
    return %arg0, %c0_i32, %c0_i32_0 : i32, i32, i32
  }
  func.func @transform_2(%arg0: i32, %arg1: i32) -> (i32, i32, i32) {
    %c0_i32 = arith.constant 0 : i32
    %c0_i32_0 = arith.constant 0 : i32
    %c0_i32_1 = arith.constant 0 : i32
    return %arg0, %c0_i32, %c0_i32_0 : i32, i32, i32
  }
  func.func @transform_3(%arg0: i32, %arg1: i32) -> (i32, i32, i32) {
    %c0_i32 = arith.constant 0 : i32
    %c0_i32_0 = arith.constant 0 : i32
    return %arg0, %arg1, %c0_i32 : i32, i32, i32
  }
  func.func @transform_4(%arg0: i32, %arg1: i32) -> (i32, i32, i32) {
    %c0_i32 = arith.constant 0 : i32
    %c0_i32_0 = arith.constant 0 : i32
    return %arg0, %arg1, %c0_i32 : i32, i32, i32
  }
}

</mosaic_0001>

<llo_original>
// kernel: tpu_custom_call.1
$region0: #{tpu_custom_call.1}
  #allocation0 [shape = 'u32[]', space=smem, size = 0x4, offset = 0x4, fixed_abs, tag = 'smem constant byte address 0x4 - core index']
  #allocation1 [shape = 'u32[144,128]{1,0:T(1,128)}', space=vmem, size = 0x12000, scoped, tag = 'internal scratch']
  %s0 = inlined_call_operand.vmem [shape: f32[2,8,32], index: 0, kind: input, shape index: {}]
  %s1 = inlined_call_operand.vmem [shape: f32[2,128,32], index: 1, kind: input, shape index: {}]
  %s2 = inlined_call_operand.vmem [shape: f32[2,128,128], index: 2, kind: input, shape index: {}]
  %s3 = inlined_call_operand.hbm [shape: f32[2,8,128], index: 3, kind: output, shape index: {0}]
  %s4 = inlined_call_operand.hbm [shape: f32[2,8,128], index: 4, kind: output, shape index: {1}]
  %5 = xla_tuple %s3, %s4
  %s6 = sld [smem:[#allocation0]]
  $region30: #{tpu_custom_call.1} parent=0
    _
  %s8 = ssub.s32 1, %s6
  %s9 = scalar_select 0, %s8, %s6
  $region1: #{tpu_custom_call.1} parent=0
    #allocation2 [shape = 'u8[8192]{0}', space=vmem, size = 0x2000, scoped, tag = 'output window, operand 0, single buffered']
    #allocation3 [shape = 's32[1]{0}', space=sflag, size = 0x4, scoped, tag = 'scoped memory for tpu_custom_call.1']
    #allocation4 [shape = 'u8[8192]{0}', space=vmem, size = 0x2000, scoped, tag = 'output window, operand 1, single buffered']
    #allocation5 [shape = 's32[1]{0}', space=sflag, size = 0x4, scoped, tag = 'scoped memory for tpu_custom_call.1']
    %10 = vsyncpa [#allocation3], 0
    %11 = vsyncpa [#allocation5], 0
    // Predicated region
    $region2: #{tpu_custom_call.1} parent=1 // pred_check
      _
    $region3: #{tpu_custom_call.1} parent=1 // pred_check_branch
      %13 = sbr.rel (0) target = $region5
    $region4: #{tpu_custom_call.1} parent=1 // pred_region
      _
    $region5: #{tpu_custom_call.1} parent=1 // pred_fallthru
      _
    // Predicated region
    $region6: #{tpu_custom_call.1} parent=1 // pred_check
      _
    $region7: #{tpu_custom_call.1} parent=1 // pred_check_branch
      %15 = sbr.rel (0) target = $region9
    $region8: #{tpu_custom_call.1} parent=1 // pred_region
      _
    $region9: #{tpu_custom_call.1} parent=1 // pred_fallthru
      _
    // Predicated region
    $region10: #{tpu_custom_call.1} parent=1 // pred_check
      _
    $region11: #{tpu_custom_call.1} parent=1 // pred_check_branch
      %17 = sbr.rel (0) target = $region13
    $region12: #{tpu_custom_call.1} parent=1 // pred_region
      _
    $region13: #{tpu_custom_call.1} parent=1 // pred_fallthru
      _
    %v18 = vld [vmem:[%s0] sm:$0xff]
    %v19 = vld [vmem:[%s0 + $0x8] sm:$0xff]
    %v20 = vld [vmem:[%s1] sm:$0xff]
    %v21 = vld [vmem:[%s1 + $0x8] sm:$0xff]
    %v22 = vld [vmem:[%s1 + $0x10] sm:$0xff]
    %v23 = vld [vmem:[%s1 + $0x18] sm:$0xff]
    %v24 = vld [vmem:[%s1 + $0x20] sm:$0xff]
    %v25 = vld [vmem:[%s1 + $0x28] sm:$0xff]
    %v26 = vld [vmem:[%s1 + $0x30] sm:$0xff]
    %v27 = vld [vmem:[%s1 + $0x38] sm:$0xff]
    %v28 = vld [vmem:[%s1 + $0x40] sm:$0xff]
    %v29 = vld [vmem:[%s1 + $0x48] sm:$0xff]
    %v30 = vld [vmem:[%s1 + $0x50] sm:$0xff]
    %v31 = vld [vmem:[%s1 + $0x58] sm:$0xff]
    %v32 = vld [vmem:[%s1 + $0x60] sm:$0xff]
    %v33 = vld [vmem:[%s1 + $0x68] sm:$0xff]
    %v34 = vld [vmem:[%s1 + $0x70] sm:$0xff]
    %v35 = vld [vmem:[%s1 + $0x78] sm:$0xff]
    %v36 = vld [vmem:[%s1 + $0x80] sm:$0xff]
    %v37 = vld [vmem:[%s1 + $0x88] sm:$0xff]
    %v38 = vld [vmem:[%s1 + $0x90] sm:$0xff]
    %v39 = vld [vmem:[%s1 + $0x98] sm:$0xff]
    %v40 = vld [vmem:[%s1 + $0xa0] sm:$0xff]
    %v41 = vld [vmem:[%s1 + $0xa8] sm:$0xff]
    %v42 = vld [vmem:[%s1 + $0xb0] sm:$0xff]
    %v43 = vld [vmem:[%s1 + $0xb8] sm:$0xff]
    %v44 = vld [vmem:[%s1 + $0xc0] sm:$0xff]
    %v45 = vld [vmem:[%s1 + $0xc8] sm:$0xff]
    %v46 = vld [vmem:[%s1 + $0xd0] sm:$0xff]
    %v47 = vld [vmem:[%s1 + $0xd8] sm:$0xff]
    %v48 = vld [vmem:[%s1 + $0xe0] sm:$0xff]
    %v49 = vld [vmem:[%s1 + $0xe8] sm:$0xff]
    %v50 = vld [vmem:[%s1 + $0xf0] sm:$0xff]
    %v51 = vld [vmem:[%s1 + $0xf8] sm:$0xff]
    %v52 = vld [vmem:[%s2] sm:$0xff]
    %v53 = vld [vmem:[%s2 + $0x8] sm:$0xff]
    %v54 = vld [vmem:[%s2 + $0x10] sm:$0xff]
    %v55 = vld [vmem:[%s2 + $0x18] sm:$0xff]
    %v56 = vld [vmem:[%s2 + $0x20] sm:$0xff]
    %v57 = vld [vmem:[%s2 + $0x28] sm:$0xff]
    %v58 = vld [vmem:[%s2 + $0x30] sm:$0xff]
    %v59 = vld [vmem:[%s2 + $0x38] sm:$0xff]
    %v60 = vld [vmem:[%s2 + $0x40] sm:$0xff]
    %v61 = vld [vmem:[%s2 + $0x48] sm:$0xff]
    %v62 = vld [vmem:[%s2 + $0x50] sm:$0xff]
    %v63 = vld [vmem:[%s2 + $0x58] sm:$0xff]
    %v64 = vld [vmem:[%s2 + $0x60] sm:$0xff]
    %v65 = vld [vmem:[%s2 + $0x68] sm:$0xff]
    %v66 = vld [vmem:[%s2 + $0x70] sm:$0xff]
    %v67 = vld [vmem:[%s2 + $0x78] sm:$0xff]
    %v68 = vld [vmem:[%s2 + $0x80] sm:$0xff]
    %v69 = vld [vmem:[%s2 + $0x88] sm:$0xff]
    %v70 = vld [vmem:[%s2 + $0x90] sm:$0xff]
    %v71 = vld [vmem:[%s2 + $0x98] sm:$0xff]
    %v72 = vld [vmem:[%s2 + $0xa0] sm:$0xff]
    %v73 = vld [vmem:[%s2 + $0xa8] sm:$0xff]
    %v74 = vld [vmem:[%s2 + $0xb0] sm:$0xff]
    %v75 = vld [vmem:[%s2 + $0xb8] sm:$0xff]
    %v76 = vld [vmem:[%s2 + $0xc0] sm:$0xff]
    %v77 = vld [vmem:[%s2 + $0xc8] sm:$0xff]
    %v78 = vld [vmem:[%s2 + $0xd0] sm:$0xff]
    %v79 = vld [vmem:[%s2 + $0xd8] sm:$0xff]
    %v80 = vld [vmem:[%s2 + $0xe0] sm:$0xff]
    %v81 = vld [vmem:[%s2 + $0xe8] sm:$0xff]
    %v82 = vld [vmem:[%s2 + $0xf0] sm:$0xff]
    %v83 = vld [vmem:[%s2 + $0xf8] sm:$0xff]
    %v84 = vmul.f32 %v18, 0.17677669
    %v85 = vmul.f32 %v19, 0.17677669
    %vm86 = vcmask 261120
    %v88 = vsel %vm86, %v84, 0
    %v91 = vsel %vm86, %v20, 0
    %v94 = vsel %vm86, %v21, 0
    %v97 = vsel %vm86, %v22, 0
    %v100 = vsel %vm86, %v23, 0
    %v103 = vsel %vm86, %v24, 0
    %v106 = vsel %vm86, %v25, 0
    %v109 = vsel %vm86, %v26, 0
    %v112 = vsel %vm86, %v27, 0
    %v115 = vsel %vm86, %v28, 0
    %v118 = vsel %vm86, %v29, 0
    %v121 = vsel %vm86, %v30, 0
    %v124 = vsel %vm86, %v31, 0
    %v127 = vsel %vm86, %v32, 0
    %v130 = vsel %vm86, %v33, 0
    %v133 = vsel %vm86, %v34, 0
    %v136 = vsel %vm86, %v35, 0
    %138 = vmatprep.subr.mxu0 0.0
    %139 = vmatpush1.xpose.msra.mxu0 %v91
    %140 = vmatprep.subr.mxu0 0.0
    %141 = vmatpush1.xpose.msra.mxu0 %v94
    %142 = vmatprep.subr.mxu0 0.0
    %143 = vmatpush1.xpose.msra.mxu0 %v97
    %144 = vmatprep.subr.mxu0 0.0
    %145 = vmatpush1.xpose.msra.mxu0 %v100
    %146 = vmatprep.subr.mxu0 0.0
    %147 = vmatpush1.xpose.msra.mxu0 %v103
    %148 = vmatprep.subr.mxu0 0.0
    %149 = vmatpush1.xpose.msra.mxu0 %v106
    %150 = vmatprep.subr.mxu0 0.0
    %151 = vmatpush1.xpose.msra.mxu0 %v109
    %152 = vmatprep.subr.mxu0 0.0
    %153 = vmatpush1.xpose.msra.mxu0 %v112
    %154 = vmatprep.subr.mxu0 0.0
    %155 = vmatpush1.xpose.msra.mxu0 %v115
    %156 = vmatprep.subr.mxu0 0.0
    %157 = vmatpush1.xpose.msra.mxu0 %v118
    %158 = vmatprep.subr.mxu0 0.0
    %159 = vmatpush1.xpose.msra.mxu0 %v121
    %160 = vmatprep.subr.mxu0 0.0
    %161 = vmatpush1.xpose.msra.mxu0 %v124
    %162 = vmatprep.subr.mxu0 0.0
    %163 = vmatpush1.xpose.msra.mxu0 %v127
    %164 = vmatprep.subr.mxu0 0.0
    %165 = vmatpush1.xpose.msra.mxu0 %v130
    %166 = vmatprep.subr.mxu0 0.0
    %167 = vmatpush1.xpose.msra.mxu0 %v133
    %168 = vmatprep.subr.mxu0 0.0
    %169 = vmatpush1.xpose.msra.mxu0 %v136
    %170 = vmatprep.subr.mxu0 0.0
    %171 = vmatpush1.xpose.msra.mxu0 0.0
    %172 = vmatprep.subr.mxu0 0.0
    %173 = vmatpush1.xpose.msra.mxu0 0.0
    %174 = vmatprep.subr.mxu0 0.0
    %175 = vmatpush1.xpose.msra.mxu0 0.0
    %176 = vmatprep.subr.mxu0 0.0
    %177 = vmatpush1.xpose.msra.mxu0 0.0
    %178 = vmatprep.subr.mxu0 0.0
    %179 = vmatpush1.xpose.msra.mxu0 0.0
    %180 = vmatprep.subr.mxu0 0.0
    %181 = vmatpush1.xpose.msra.mxu0 0.0
    %182 = vmatprep.subr.mxu0 0.0
    %183 = vmatpush1.xpose.msra.mxu0 0.0
    %184 = vmatprep.subr.mxu0 0.0
    %185 = vmatpush1.xpose.msra.mxu0 0.0
    %186 = vmatprep.subr.mxu0 0.0
    %187 = vmatpush1.xpose.msra.mxu0 0.0
    %188 = vmatprep.subr.mxu0 0.0
    %189 = vmatpush1.xpose.msra.mxu0 0.0
    %190 = vmatprep.subr.mxu0 0.0
    %191 = vmatpush1.xpose.msra.mxu0 0.0
    %192 = vmatprep.subr.mxu0 0.0
    %193 = vmatpush1.xpose.msra.mxu0 0.0
    %194 = vmatprep.subr.mxu0 0.0
    %195 = vmatpush1.xpose.msra.mxu0 0.0
    %196 = vmatprep.subr.mxu0 0.0
    %197 = vmatpush1.xpose.msra.mxu0 0.0
    %198 = vmatprep.subr.mxu0 0.0
    %199 = vmatpush1.xpose.msra.mxu0 0.0
    %200 = vmatprep.subr.mxu0 0.0
    %201 = vmatpush1.xpose.msra.mxu0 0.0
    %202 = vmatprep.mubr.f32.mxu0 0.0
    %203 = vmatmul.mubr.f32.gmra.mrb[0].mxu0 %v88
    %v204 = vpop.f32.mrb[0].mxu0
    %v205 = vadd.f32 0.0, %v204
    %v206 = vpop.f32.mrb[0].mxu0
    %207 = vdwg.mxu0
    %v209 = vsel %vm86, %v85, 0
    %v212 = vsel %vm86, %v36, 0
    %v215 = vsel %vm86, %v37, 0
    %v218 = vsel %vm86, %v38, 0
    %v221 = vsel %vm86, %v39, 0
    %v224 = vsel %vm86, %v40, 0
    %v227 = vsel %vm86, %v41, 0
    %v230 = vsel %vm86, %v42, 0
    %v233 = vsel %vm86, %v43, 0
    %v236 = vsel %vm86, %v44, 0
    %v239 = vsel %vm86, %v45, 0
    %v242 = vsel %vm86, %v46, 0
    %v245 = vsel %vm86, %v47, 0
    %v248 = vsel %vm86, %v48, 0
    %v251 = vsel %vm86, %v49, 0
    %v254 = vsel %vm86, %v50, 0
    %v257 = vsel %vm86, %v51, 0
    %259 = vmatprep.subr.mxu0 0.0
    %260 = vmatpush1.xpose.msra.mxu0 %v212
    %261 = vmatprep.subr.mxu0 0.0
    %262 = vmatpush1.xpose.msra.mxu0 %v215
    %263 = vmatprep.subr.mxu0 0.0
    %264 = vmatpush1.xpose.msra.mxu0 %v218
    %265 = vmatprep.subr.mxu0 0.0
    %266 = vmatpush1.xpose.msra.mxu0 %v221
    %267 = vmatprep.subr.mxu0 0.0
    %268 = vmatpush1.xpose.msra.mxu0 %v224
    %269 = vmatprep.subr.mxu0 0.0
    %270 = vmatpush1.xpose.msra.mxu0 %v227
    %271 = vmatprep.subr.mxu0 0.0
    %272 = vmatpush1.xpose.msra.mxu0 %v230
    %273 = vmatprep.subr.mxu0 0.0
    %274 = vmatpush1.xpose.msra.mxu0 %v233
    %275 = vmatprep.subr.mxu0 0.0
    %276 = vmatpush1.xpose.msra.mxu0 %v236
    %277 = vmatprep.subr.mxu0 0.0
    %278 = vmatpush1.xpose.msra.mxu0 %v239
    %279 = vmatprep.subr.mxu0 0.0
    %280 = vmatpush1.xpose.msra.mxu0 %v242
    %281 = vmatprep.subr.mxu0 0.0
    %282 = vmatpush1.xpose.msra.mxu0 %v245
    %283 = vmatprep.subr.mxu0 0.0
    %284 = vmatpush1.xpose.msra.mxu0 %v248
    %285 = vmatprep.subr.mxu0 0.0
    %286 = vmatpush1.xpose.msra.mxu0 %v251
    %287 = vmatprep.subr.mxu0 0.0
    %288 = vmatpush1.xpose.msra.mxu0 %v254
    %289 = vmatprep.subr.mxu0 0.0
    %290 = vmatpush1.xpose.msra.mxu0 %v257
    %291 = vmatprep.subr.mxu0 0.0
    %292 = vmatpush1.xpose.msra.mxu0 0.0
    %293 = vmatprep.subr.mxu0 0.0
    %294 = vmatpush1.xpose.msra.mxu0 0.0
    %295 = vmatprep.subr.mxu0 0.0
    %296 = vmatpush1.xpose.msra.mxu0 0.0
    %297 = vmatprep.subr.mxu0 0.0
    %298 = vmatpush1.xpose.msra.mxu0 0.0
    %299 = vmatprep.subr.mxu0 0.0
    %300 = vmatpush1.xpose.msra.mxu0 0.0
    %301 = vmatprep.subr.mxu0 0.0
    %302 = vmatpush1.xpose.msra.mxu0 0.0
    %303 = vmatprep.subr.mxu0 0.0
    %304 = vmatpush1.xpose.msra.mxu0 0.0
    %305 = vmatprep.subr.mxu0 0.0
    %306 = vmatpush1.xpose.msra.mxu0 0.0
    %307 = vmatprep.subr.mxu0 0.0
    %308 = vmatpush1.xpose.msra.mxu0 0.0
    %309 = vmatprep.subr.mxu0 0.0
    %310 = vmatpush1.xpose.msra.mxu0 0.0
    %311 = vmatprep.subr.mxu0 0.0
    %312 = vmatpush1.xpose.msra.mxu0 0.0
    %313 = vmatprep.subr.mxu0 0.0
    %314 = vmatpush1.xpose.msra.mxu0 0.0
    %315 = vmatprep.subr.mxu0 0.0
    %316 = vmatpush1.xpose.msra.mxu0 0.0
    %317 = vmatprep.subr.mxu0 0.0
    %318 = vmatpush1.xpose.msra.mxu0 0.0
    %319 = vmatprep.subr.mxu0 0.0
    %320 = vmatpush1.xpose.msra.mxu0 0.0
    %321 = vmatprep.subr.mxu0 0.0
    %322 = vmatpush1.xpose.msra.mxu0 0.0
    %323 = vmatprep.mubr.f32.mxu0 0.0
    %324 = vmatmul.mubr.f32.gmra.mrb[0].mxu0 %v209
    %v325 = vpop.f32.mrb[0].mxu0
    %v326 = vadd.f32 0.0, %v325
    %v327 = vpop.f32.mrb[0].mxu0
    %328 = vdwg.mxu0
    %v329 = vlaneseq
    %v330 = vand.u32 %v329, 127
    %vm331 = vcmp.lt.s32.totalorder %v330, 8
    %v332 = vsel %vm331, %v205, -inf
    %v333 = vsel %vm331, %v326, -inf
    %334 = vmax.xlane.f32.xlu0 %v332
    %v335 = vpop.xlane.xlu0 %334
    %336 = vmax.xlane.f32.xlu0 %v333
    %v337 = vpop.xlane.xlu0 %336
    %v338 = vsub.f32 %v332, %v335
    %v339 = vsub.f32 %v333, %v337
    %v340 = vmul.f32 %v338, 1.442695
    %v341 = vpow.pop %v340
    %v342 = vmul.f32 %v339, 1.442695
    %v343 = vpow.pop %v342
    %344 = vadd.xlane.f32.xlu0 %v341
    %v345 = vpop.xlane.xlu0 %344
    %346 = vadd.xlane.f32.xlu0 %v343
    %v347 = vpop.xlane.xlu0 %346
    %v348 = vrcp.pop %v345
    %v349 = vrcp.pop %v347
    %v350 = vmul.f32 %v341, %v348
    %v351 = vmul.f32 %v343, %v349
    %352 = vmatprep.subr.mxu0 0.0
    %353 = vmatpush1.msra.mxu0 %v52
    %354 = vmatprep.subr.mxu0 0.0
    %355 = vmatpush1.msra.mxu0 %v53
    %356 = vmatprep.subr.mxu0 0.0
    %357 = vmatpush1.msra.mxu0 %v54
    %358 = vmatprep.subr.mxu0 0.0
    %359 = vmatpush1.msra.mxu0 %v55
    %360 = vmatprep.subr.mxu0 0.0
    %361 = vmatpush1.msra.mxu0 %v56
    %362 = vmatprep.subr.mxu0 0.0
    %363 = vmatpush1.msra.mxu0 %v57
    %364 = vmatprep.subr.mxu0 0.0
    %365 = vmatpush1.msra.mxu0 %v58
    %366 = vmatprep.subr.mxu0 0.0
    %367 = vmatpush1.msra.mxu0 %v59
    %368 = vmatprep.subr.mxu0 0.0
    %369 = vmatpush1.msra.mxu0 %v60
    %370 = vmatprep.subr.mxu0 0.0
    %371 = vmatpush1.msra.mxu0 %v61
    %372 = vmatprep.subr.mxu0 0.0
    %373 = vmatpush1.msra.mxu0 %v62
    %374 = vmatprep.subr.mxu0 0.0
    %375 = vmatpush1.msra.mxu0 %v63
    %376 = vmatprep.subr.mxu0 0.0
    %377 = vmatpush1.msra.mxu0 %v64
    %378 = vmatprep.subr.mxu0 0.0
    %379 = vmatpush1.msra.mxu0 %v65
    %380 = vmatprep.subr.mxu0 0.0
    %381 = vmatpush1.msra.mxu0 %v66
    %382 = vmatprep.subr.mxu0 0.0
    %383 = vmatpush1.msra.mxu0 %v67
    %384 = vmatprep.subr.mxu0 0.0
    %385 = vmatpush1.msra.mxu0 0.0
    %386 = vmatprep.subr.mxu0 0.0
    %387 = vmatpush1.msra.mxu0 0.0
    %388 = vmatprep.subr.mxu0 0.0
    %389 = vmatpush1.msra.mxu0 0.0
    %390 = vmatprep.subr.mxu0 0.0
    %391 = vmatpush1.msra.mxu0 0.0
    %392 = vmatprep.subr.mxu0 0.0
    %393 = vmatpush1.msra.mxu0 0.0
    %394 = vmatprep.subr.mxu0 0.0
    %395 = vmatpush1.msra.mxu0 0.0
    %396 = vmatprep.subr.mxu0 0.0
    %397 = vmatpush1.msra.mxu0 0.0
    %398 = vmatprep.subr.mxu0 0.0
    %399 = vmatpush1.msra.mxu0 0.0
    %400 = vmatprep.subr.mxu0 0.0
    %401 = vmatpush1.msra.mxu0 0.0
    %402 = vmatprep.subr.mxu0 0.0
    %403 = vmatpush1.msra.mxu0 0.0
    %404 = vmatprep.subr.mxu0 0.0
    %405 = vmatpush1.msra.mxu0 0.0
    %406 = vmatprep.subr.mxu0 0.0
    %407 = vmatpush1.msra.mxu0 0.0
    %408 = vmatprep.subr.mxu0 0.0
    %409 = vmatpush1.msra.mxu0 0.0
    %410 = vmatprep.subr.mxu0 0.0
    %411 = vmatpush1.msra.mxu0 0.0
    %412 = vmatprep.subr.mxu0 0.0
    %413 = vmatpush1.msra.mxu0 0.0
    %414 = vmatprep.subr.mxu0 0.0
    %415 = vmatpush1.msra.mxu0 0.0
    %416 = vmatprep.mubr.f32.mxu0 0.0
    %417 = vmatmul.mubr.f32.gmra.mrb[0].mxu0 %v350
    %v418 = vpop.f32.mrb[0].mxu0
    %v419 = vadd.f32 0.0, %v418
    %v420 = vpop.f32.mrb[0].mxu0
    %421 = vdwg.mxu0
    %422 = vmatprep.subr.mxu0 0.0
    %423 = vmatpush1.msra.mxu0 %v68
    %424 = vmatprep.subr.mxu0 0.0
    %425 = vmatpush1.msra.mxu0 %v69
    %426 = vmatprep.subr.mxu0 0.0
    %427 = vmatpush1.msra.mxu0 %v70
    %428 = vmatprep.subr.mxu0 0.0
    %429 = vmatpush1.msra.mxu0 %v71
    %430 = vmatprep.subr.mxu0 0.0
    %431 = vmatpush1.msra.mxu0 %v72
    %432 = vmatprep.subr.mxu0 0.0
    %433 = vmatpush1.msra.mxu0 %v73
    %434 = vmatprep.subr.mxu0 0.0
    %435 = vmatpush1.msra.mxu0 %v74
    %436 = vmatprep.subr.mxu0 0.0
    %437 = vmatpush1.msra.mxu0 %v75
    %438 = vmatprep.subr.mxu0 0.0
    %439 = vmatpush1.msra.mxu0 %v76
    %440 = vmatprep.subr.mxu0 0.0
    %441 = vmatpush1.msra.mxu0 %v77
    %442 = vmatprep.subr.mxu0 0.0
    %443 = vmatpush1.msra.mxu0 %v78
    %444 = vmatprep.subr.mxu0 0.0
    %445 = vmatpush1.msra.mxu0 %v79
    %446 = vmatprep.subr.mxu0 0.0
    %447 = vmatpush1.msra.mxu0 %v80
    %448 = vmatprep.subr.mxu0 0.0
    %449 = vmatpush1.msra.mxu0 %v81
    %450 = vmatprep.subr.mxu0 0.0
    %451 = vmatpush1.msra.mxu0 %v82
    %452 = vmatprep.subr.mxu0 0.0
    %453 = vmatpush1.msra.mxu0 %v83
    %454 = vmatprep.subr.mxu0 0.0
    %455 = vmatpush1.msra.mxu0 0.0
    %456 = vmatprep.subr.mxu0 0.0
    %457 = vmatpush1.msra.mxu0 0.0
    %458 = vmatprep.subr.mxu0 0.0
    %459 = vmatpush1.msra.mxu0 0.0
    %460 = vmatprep.subr.mxu0 0.0
    %461 = vmatpush1.msra.mxu0 0.0
    %462 = vmatprep.subr.mxu0 0.0
    %463 = vmatpush1.msra.mxu0 0.0
    %464 = vmatprep.subr.mxu0 0.0
    %465 = vmatpush1.msra.mxu0 0.0
    %466 = vmatprep.subr.mxu0 0.0
    %467 = vmatpush1.msra.mxu0 0.0
    %468 = vmatprep.subr.mxu0 0.0
    %469 = vmatpush1.msra.mxu0 0.0
    %470 = vmatprep.subr.mxu0 0.0
    %471 = vmatpush1.msra.mxu0 0.0
    %472 = vmatprep.subr.mxu0 0.0
    %473 = vmatpush1.msra.mxu0 0.0
    %474 = vmatprep.subr.mxu0 0.0
    %475 = vmatpush1.msra.mxu0 0.0
    %476 = vmatprep.subr.mxu0 0.0
    %477 = vmatpush1.msra.mxu0 0.0
    %478 = vmatprep.subr.mxu0 0.0
    %479 = vmatpush1.msra.mxu0 0.0
    %480 = vmatprep.subr.mxu0 0.0
    %481 = vmatpush1.msra.mxu0 0.0
    %482 = vmatprep.subr.mxu0 0.0
    %483 = vmatpush1.msra.mxu0 0.0
    %484 = vmatprep.subr.mxu0 0.0
    %485 = vmatpush1.msra.mxu0 0.0
    %486 = vmatprep.mubr.f32.mxu0 0.0
    %487 = vmatmul.mubr.f32.gmra.mrb[0].mxu0 %v351
    %v488 = vpop.f32.mrb[0].mxu0
    %v489 = vadd.f32 0.0, %v488
    %v490 = vpop.f32.mrb[0].mxu0
    %491 = vdwg.mxu0
    %492 = vst [vmem:[#allocation4] sm:$0xff] %v350
    %493 = vst [vmem:[#allocation4 + $0x8] sm:$0xff] %v351
    %494 = vst [vmem:[#allocation2] sm:$0xff] %v419
    %495 = vst [vmem:[#allocation2 + $0x8] sm:$0xff] %v489
    // Predicated region
    $region14: #{tpu_custom_call.1} parent=1 // pred_check
      _
    $region15: #{tpu_custom_call.1} parent=1 // pred_check_branch
      %497 = sbr.rel (0) target = $region17
    $region16: #{tpu_custom_call.1} parent=1 // pred_region
      %s499 = ssub.s32 256, 256
      %500 = vsyncadd [#allocation3], %s499
      %s501 = sshll.u32 [#allocation2], 4
      %s502 = int_to_ptr.vmem [resolvable:$true] %s501
      %507 = dma.vmem_to_hbm [thread:$0]  %s502, 256, %s3, [#allocation3], 128, 128, 8
    $region17: #{tpu_custom_call.1} parent=1 // pred_fallthru
      _
    // Predicated region
    $region18: #{tpu_custom_call.1} parent=1 // pred_check
      _
    $region19: #{tpu_custom_call.1} parent=1 // pred_check_branch
      %509 = sbr.rel (0) target = $region21
    $region20: #{tpu_custom_call.1} parent=1 // pred_region
      %s511 = ssub.s32 256, 256
      %512 = vsyncadd [#allocation5], %s511
      %s513 = sshll.u32 [#allocation4], 4
      %s514 = int_to_ptr.vmem [resolvable:$true] %s513
      %519 = dma.vmem_to_hbm [thread:$0]  %s514, 256, %s4, [#allocation5], 128, 128, 8
    $region21: #{tpu_custom_call.1} parent=1 // pred_fallthru
      _
    // Predicated region
    $region22: #{tpu_custom_call.1} parent=1 // pred_check
      _
    $region23: #{tpu_custom_call.1} parent=1 // pred_check_branch
      %521 = sbr.rel (0) target = $region25
    $region24: #{tpu_custom_call.1} parent=1 // pred_region
      %522 = dma.done [#allocation3], 256
    $region25: #{tpu_custom_call.1} parent=1 // pred_fallthru
      _
    // Predicated region
    $region26: #{tpu_custom_call.1} parent=1 // pred_check
      _
    $region27: #{tpu_custom_call.1} parent=1 // pred_check_branch
      %524 = sbr.rel (0) target = $region29
    $region28: #{tpu_custom_call.1} parent=1 // pred_region
      %525 = dma.done [#allocation5], 256
    $region29: #{tpu_custom_call.1} parent=1 // pred_fallthru
      _
    %526 = vsyncpa [#allocation3], 1
    %527 = vsyncpa [#allocation5], 1

</llo_original>
